<compile_context>
chip_gen: v5e
topology: v5e:2x2
jax: 0.10.0
libtpu: 0.0.40
codegen_flags: <defaults>
</compile_context>

<pallas_src>
import jax
import jax.numpy as jnp
from jax.experimental import pallas as pl
from jax.experimental.pallas import tpu as pltpu


OUT_FEATURES = 4
IN_FEATURES = 1


def _round_up(a, m):
    return -(-a // m) * m


def _vmem_capacity_bytes():
    """Physical VMEM of the local TensorCore; conservative fallback = v7x."""
    try:
        return int(pltpu.get_tpu_info().vmem_capacity_bytes)
    except Exception:
        return 64 << 20


def _pick_tile(n, tn):
    """Pick a lane-dense batch tile sized from the VMEM budget.

    Double-buffered pipeline footprint ~= 128 * tn bytes:
      x block (1, tn)  pads sublanes to 8 -> 32*tn B per buffer
      y block (4, tn)  pads sublanes to 8 -> 32*tn B per buffer
      2 buffers each (default pipelining)  -> 128*tn B total.
    Targeting ~1/4 of physical VMEM gives tn<=262144 on v5e/v6e (128 MiB) and
    tn<=131072 on v7x (64 MiB): per-step DMA time (~2-4 us) then dominates the
    ~0.35 us fixed per-step overhead on this purely memory-bound op.
    """
    vmem = _vmem_capacity_bytes()
    budget = vmem // 4
    tn_cap = (budget // 128) // 128 * 128     # lanes, multiple of 128
    tn_cap = max(128, min(tn_cap, 262144))    # >256K lanes buys nothing
    if tn is None:
        tn = tn_cap
    tn = max(128, min(int(tn), tn_cap))
    tn = _round_up(tn, 128)
    tn = min(tn, _round_up(n, 128))           # never wider than padded batch
    vmem_limit = int(min(vmem * 3 // 4, 96 << 20))
    return tn, vmem_limit


def linear_outer_kernel(x_ref, wb_ref, o_ref):
    """Pure VPU broadcast FMA: [OUT,1]*[1,TN]+[OUT,1] -> [OUT,TN]. No MXU."""
    x = x_ref[...].astype(jnp.float32)    # [1, TN]   batch on the lane axis
    w = wb_ref[:, 0:1]                    # [OUT, 1]  VMEM-resident across tiles
    b = wb_ref[:, 1:2]                    # [OUT, 1]
    o_ref[...] = (w * x + b).astype(o_ref.dtype)


def linear_forward_t(x, weight, bias, *, tn=None):
    """Lane-dense y^T = (x @ W^T + b)^T of shape [OUT, N] (no transpose).

    x: [N, 1], weight: [OUT, 1] (torch [out, in] layout), bias: [OUT].
    Preferred entry point for consumers that can accept the [OUT, N] layout.
    """
    n, in_features = x.shape
    out_features = weight.shape[0]
    assert in_features == 1 and weight.shape[1] == 1

    tn_eff, vmem_limit = _pick_tile(n, tn)
    num_tiles = pl.cdiv(n, tn_eff)

    # Free metadata reshape of the contiguous [N, 1] input: batch -> lanes.
    x_row = x.reshape(1, n)
    # Fold weight and bias into one tiny VMEM-resident operand.
    wb = jnp.concatenate(
        [weight.reshape(out_features, 1), bias.reshape(out_features, 1)],
        axis=1,
    ).astype(jnp.float32)                                    # [OUT, 2]

    return pl.pallas_call(
        linear_outer_kernel,
        out_shape=jax.ShapeDtypeStruct((out_features, n), x.dtype),
        grid=(num_tiles,),
        in_specs=[
            pl.BlockSpec((1, tn_eff), lambda i: (0, i)),             # x tile
            pl.BlockSpec((out_features, 2), lambda i: (0, 0)),       # w|b resident
        ],
        out_specs=pl.BlockSpec((out_features, tn_eff), lambda i: (0, i)),
        compiler_params=pltpu.CompilerParams(
            dimension_semantics=("parallel",),   # megacore batch split on v7x
            vmem_limit_bytes=vmem_limit,
        ),
    )(x_row, wb)


def linear_forward(x, weight, bias, *, tn=None, min_pallas_n=1024):
    """nn.Linear(1, 4) forward: returns [N, OUT] in x.dtype."""
    n = x.shape[0]
    if n < min_pallas_n:
        # Tiny batch: one fused XLA broadcast beats any custom-call launch plus
        # layout plumbing for a ~4N-FLOP op (per perf review).
        y = (x.astype(jnp.float32) * weight[:, 0].astype(jnp.float32)
             + bias.astype(jnp.float32))
        return y.astype(x.dtype)
    y_t = linear_forward_t(x, weight, bias, tn=tn)
    # Layout adapter back to the module's [N, OUT]: one XLA transpose pass.
    return y_t.T


if __name__ == "__main__":
    key = jax.random.PRNGKey(0)
    k_w, k_b, k_x1, k_x2, k_x3 = jax.random.split(key, 5)

    # PyTorch nn.Linear(1, 4) default init bound = 1/sqrt(fan_in) = 1.0.
    weight = jax.random.uniform(
        k_w, (OUT_FEATURES, IN_FEATURES), jnp.float32, -1.0, 1.0)  # [out, in]
    bias = jax.random.uniform(k_b, (OUT_FEATURES,), jnp.float32, -1.0, 1.0)

    def ref(x):
        return x @ weight.T + bias

    # 1) Tiny batch: fused-XLA fallback path (launch overhead dominates).
    x_small = jax.random.normal(k_x1, (8, IN_FEATURES), jnp.float32)
    y_small = jax.block_until_ready(linear_forward(x_small, weight, bias))
    assert y_small.shape == (8, OUT_FEATURES)
    assert jnp.allclose(y_small, ref(x_small), atol=1e-5, rtol=1e-5), "small mismatch"

    # 2) Ragged batch through the Pallas kernel with a multi-step grid:
    #    N=3000, tn=1024 -> grid=(3,), final block is partial (no pre-pad copy).
    x_ragged = jax.random.normal(k_x2, (3000, IN_FEATURES), jnp.float32)
    y_ragged = jax.block_until_ready(
        linear_forward(x_ragged, weight, bias, tn=1024))
    assert y_ragged.shape == (3000, OUT_FEATURES)
    assert jnp.allclose(y_ragged, ref(x_ragged), atol=1e-5, rtol=1e-5), "ragged mismatch"

    # 3) Default auto-sized tile (single grid step at this N); also exercise
    #    the transpose-free [OUT, N] entry point.
    x_def = jax.random.normal(k_x3, (2048, IN_FEATURES), jnp.float32)
    y_def = jax.block_until_ready(linear_forward(x_def, weight, bias))
    y_def_t = jax.block_until_ready(linear_forward_t(x_def, weight, bias))
    assert y_def.shape == (2048, OUT_FEATURES)
    assert jnp.allclose(y_def, ref(x_def), atol=1e-5, rtol=1e-5), "default mismatch"
    assert jnp.allclose(y_def_t.T, y_def, atol=1e-5, rtol=1e-5), "lane-dense mismatch"

    print("KERNEL_OK")
</pallas_src>

<mosaic_0001>
module attributes {stable_mosaic.version = 11 : i64} {
  func.func @linear_outer_kernel(%arg0: i32, %arg1: memref<1x1024xf32, #tpu.memory_space<vmem>>, %arg2: memref<4x2xf32, #tpu.memory_space<vmem>>, %arg3: memref<4x1024xf32, #tpu.memory_space<vmem>>) attributes {dimension_semantics = [#tpu.dimension_semantics<parallel>], iteration_bounds = array<i64: 3>, scalar_prefetch = 0 : i64, scratch_operands = 0 : i64, tpu.core_type = #tpu.core_type<tc>, window_params = [{transform_indices = @transform_0, window_bounds = array<i64: 1, 1024>}, {pipeline_mode = #tpu.pipeline_mode<synchronous>, transform_indices = @transform_1, window_bounds = array<i64: 4, 2>}, {transform_indices = @transform_2, window_bounds = array<i64: 4, 1024>}]} {
    %c0 = arith.constant 0 : index
    %c0_0 = arith.constant 0 : index
    %0 = vector.load %arg1[%c0, %c0_0] : memref<1x1024xf32, #tpu.memory_space<vmem>>, vector<1x1024xf32>
    %c0_1 = arith.constant 0 : index
    %c0_2 = arith.constant 0 : index
    %1 = vector.load %arg2[%c0_1, %c0_2] : memref<4x2xf32, #tpu.memory_space<vmem>>, vector<4x1xf32>
    %c0_3 = arith.constant 0 : index
    %c1 = arith.constant 1 : index
    %2 = vector.load %arg2[%c0_3, %c1] : memref<4x2xf32, #tpu.memory_space<vmem>>, vector<4x1xf32>
    %3 = vector.broadcast %1 : vector<4x1xf32> to vector<4x1024xf32>
    %4 = vector.broadcast %0 : vector<1x1024xf32> to vector<4x1024xf32>
    %5 = arith.mulf %3, %4 : vector<4x1024xf32>
    %6 = vector.broadcast %2 : vector<4x1xf32> to vector<4x1024xf32>
    %7 = arith.addf %5, %6 : vector<4x1024xf32>
    %c0_4 = arith.constant 0 : index
    %c0_5 = arith.constant 0 : index
    %8 = vector.load %arg3[%c0_4, %c0_5] : memref<4x1024xf32, #tpu.memory_space<vmem>>, vector<4x1024xf32>
    tpu.vector_store %arg3[%c0_4, %c0_5], %7 {strides = array<i32>} : memref<4x1024xf32, #tpu.memory_space<vmem>>, vector<4x1024xf32>,
    return
  }
  func.func @transform_0(%arg0: i32) -> (i32, i32) {
    %c0_i32 = arith.constant 0 : i32
    %c0_i32_0 = arith.constant 0 : i32
    return %c0_i32, %arg0 : i32, i32
  }
  func.func @transform_1(%arg0: i32) -> (i32, i32) {
    %c0_i32 = arith.constant 0 : i32
    %c0_i32_0 = arith.constant 0 : i32
    %c0_i32_1 = arith.constant 0 : i32
    return %c0_i32, %c0_i32_0 : i32, i32
  }
  func.func @transform_2(%arg0: i32) -> (i32, i32) {
    %c0_i32 = arith.constant 0 : i32
    %c0_i32_0 = arith.constant 0 : i32
    return %c0_i32, %arg0 : i32, i32
  }
}

</mosaic_0001>

<llo_original>
// kernel: tpu_custom_call.1
$region0: #{tpu_custom_call.1}
  #allocation0 [shape = 'u32[]', space=smem, size = 0x4, offset = 0x4, fixed_abs, tag = 'smem constant byte address 0x4 - core index']
  #allocation1 [shape = 'u32[72,128]{1,0:T(1,128)}', space=vmem, size = 0x9000, scoped, tag = 'internal scratch']
  %s0 = inlined_call_operand.hbm [shape: f32[1,3000], index: 0, kind: input, shape index: {}]
  %s1 = inlined_call_operand.vmem [shape: f32[4,2], index: 1, kind: input, shape index: {}]
  %s2 = inlined_call_operand.hbm [shape: f32[4,3000], index: 2, kind: output, shape index: {}]
  %s3 = sld [smem:[#allocation0]]
  $region45: #{tpu_custom_call.1} parent=0
    _
  %s5 = ssub.s32 1, %s3
  %s6 = scalar_select 0, %s5, %s3
  $region1: #{tpu_custom_call.1} parent=0
    #allocation2 [shape = 'u8[8192]{0}', space=vmem, size = 0x2000, scoped, tag = 'input window, operand 0']
    #allocation3 [shape = 's32[2]{0}', space=sflag, size = 0x8, scoped, tag = 'scoped memory for tpu_custom_call.1']
    #allocation4 [shape = 's32[2]{0}', space=sflag, size = 0x8, scoped, tag = 'scoped memory for tpu_custom_call.1']
    #allocation5 [shape = 'u8[32768]{0}', space=vmem, size = 0x8000, scoped, tag = 'output window, operand 0']
    %7 = vsyncpa [#allocation3], 0
    %s8 = scalar_lea.sflag [#allocation3], 1
    %9 = vsyncpa %s8, 0
    %10 = vsyncpa [#allocation4], 0
    %s11 = scalar_lea.sflag [#allocation4], 1
    %12 = vsyncpa %s11, 0
    loop: start=0, step=1, limit=5
    $region2: #{tpu_custom_call.1} parent=1 // loop_pre_header
      _
    $region3: #{tpu_custom_call.1} parent=1 // loop_header
      %s14 = sphi 0, %s18
      %p15 = scmp.ge.s32.totalorder %s14, 5
      %s24 = sphi 0, %s26
      %s27 = sphi 0, %s24
      %s28 = sphi 0, %s27
      %s44 = sphi 0, %s28
      %s48 = sphi 0, %s48
      %s50 = sphi 0, %s48
      %s51 = sphi 0, %s50
      %s65 = sphi 0, %s51
      %s71 = sphi 0, %s73
      %s74 = sphi 0, %s71
      %s75 = sphi 0, %s74
      %s91 = sphi 0, %s75
    $region4: #{tpu_custom_call.1} parent=1 // loop_header_branch
      %17 = sbr.rel (%p15) target = $region8
    $region5: #{tpu_custom_call.1} parent=1 // loop_body
      %s19 = ssub.s32 %s14, 1
      %s20 = ssub.s32 %s14, 2
      %s21 = sadd.s32 %s14, 1
      %s22 = ssub.s32 %s14, %s21
      %p23 = scmp.eq.s32.totalorder %s22, 0
      %s25 = sadd.s32 %s24, 1
      %s26 = scalar_select %p23, %s24, %s25
      %p29 = pneg %p23
      %p30 = scmp.eq.s32.totalorder %s14, 2
      %p31 = por %p29, %p30
      %p32 = scmp.ne.s32.totalorder %s24, %s27
      %p33 = scmp.eq.s32.totalorder %s14, 0
      %p34 = por %p32, %p33
      %p35 = scmp.ne.s32.totalorder %s24, %s27
      %p36 = scmp.eq.s32.totalorder %s19, 2
      %p37 = por %p35, %p36
      %p38 = scmp.ne.s32.totalorder %s27, %s28
      %p39 = scmp.eq.s32.totalorder %s19, 0
      %p40 = por %p38, %p39
      %p41 = scmp.ne.s32.totalorder %s27, %s28
      %p42 = scmp.eq.s32.totalorder %s20, 2
      %p43 = por %p41, %p42
      %p45 = scmp.ne.s32.totalorder %s28, %s44
      %p46 = scmp.eq.s32.totalorder %s20, 0
      %p47 = por %p45, %p46
      %s49 = sadd.s32 %s48, 1
      %p52 = scmp.eq.s32.totalorder %s14, 2
      %p53 = scmp.ne.s32.totalorder %s48, %s50
      %p54 = scmp.eq.s32.totalorder %s14, 0
      %p55 = por %p53, %p54
      %p56 = scmp.ne.s32.totalorder %s48, %s50
      %p57 = scmp.eq.s32.totalorder %s19, 2
      %p58 = por %p56, %p57
      %p59 = scmp.ne.s32.totalorder %s50, %s51
      %p60 = scmp.eq.s32.totalorder %s19, 0
      %p61 = por %p59, %p60
      %p62 = scmp.ne.s32.totalorder %s50, %s51
      %p63 = scmp.eq.s32.totalorder %s20, 2
      %p64 = por %p62, %p63
      %p66 = scmp.ne.s32.totalorder %s51, %s65
      %p67 = scmp.eq.s32.totalorder %s20, 0
      %p68 = por %p66, %p67
      %s69 = ssub.s32 %s14, %s21
      %p70 = scmp.eq.s32.totalorder %s69, 0
      %s72 = sadd.s32 %s71, 1
      %s73 = scalar_select %p70, %s71, %s72
      %p76 = pneg %p70
      %p77 = scmp.eq.s32.totalorder %s14, 2
      %p78 = por %p76, %p77
      %p79 = scmp.ne.s32.totalorder %s71, %s74
      %p80 = scmp.eq.s32.totalorder %s14, 0
      %p81 = por %p79, %p80
      %p82 = scmp.ne.s32.totalorder %s71, %s74
      %p83 = scmp.eq.s32.totalorder %s19, 2
      %p84 = por %p82, %p83
      %p85 = scmp.ne.s32.totalorder %s74, %s75
      %p86 = scmp.eq.s32.totalorder %s19, 0
      %p87 = por %p85, %p86
      %p88 = scmp.ne.s32.totalorder %s74, %s75
      %p89 = scmp.eq.s32.totalorder %s20, 2
      %p90 = por %p88, %p89
      %p92 = scmp.ne.s32.totalorder %s75, %s91
      %p93 = scmp.eq.s32.totalorder %s20, 0
      %p94 = por %p92, %p93
      %p95 = scmp.le.s32.totalorder 1, %s14
      %p96 = scmp.lt.s32.totalorder %s14, 4
      %p97 = pnand %p95, %p96
      %p98 = pneg %p97
      // Predicated region
      $region9: #{tpu_custom_call.1} parent=5 // pred_check
        _
      $region10: #{tpu_custom_call.1} parent=5 // pred_check_branch
        %100 = sbr.rel (%p97) target = $region12
      $region11: #{tpu_custom_call.1} parent=5 // pred_region
        %s101 = ssub.s32 %s14, 1
        // Predicated region
        $region13: #{tpu_custom_call.1} parent=11 // pred_check
          %p102 = pneg %p61
        $region14: #{tpu_custom_call.1} parent=11 // pred_check_branch
          %104 = sbr.rel (%p102) target = $region16
        $region15: #{tpu_custom_call.1} parent=11 // pred_region
          _
        $region16: #{tpu_custom_call.1} parent=11 // pred_fallthru
          _
      $region12: #{tpu_custom_call.1} parent=5 // pred_fallthru
        _
      %p105 = scmp.lt.s32.totalorder %s14, 3
      // Predicated region
      $region17: #{tpu_custom_call.1} parent=5 // pred_check
        %p106 = pneg %p105
      $region18: #{tpu_custom_call.1} parent=5 // pred_check_branch
        %108 = sbr.rel (%p106) target = $region20
      $region19: #{tpu_custom_call.1} parent=5 // pred_region
        // Predicated region
        $region21: #{tpu_custom_call.1} parent=19 // pred_check
          %p109 = pneg %p34
        $region22: #{tpu_custom_call.1} parent=19 // pred_check_branch
          %111 = sbr.rel (%p109) target = $region24
        $region23: #{tpu_custom_call.1} parent=19 // pred_region
          %s112 = sand.u32 %s24, 1
          %s113 = scalar_lea.sflag [#allocation3], %s112
          %s114 = sand.u32 %s24, 1
          %s115 = smul.addr %s114, 8
          %s116 = scalar_lea.vmem [#allocation2], %s115
          %s117 = smul.u32 8, %s14
          %119 = vsyncadd %s113, 0
          %s120 = scalar_lea.hbm %s0, %s117
          %s122 = sshll.u32 %s120, 4
          %s123 = int_to_ptr.hbm [resolvable:$true] %s122
          %s124 = sshll.u32 %s116, 4
          %s125 = int_to_ptr.vmem [resolvable:$true] %s124
          %127 = dma.hbm_to_vmem [thread:$0]  %s123, 128, %s125, %s113
        $region24: #{tpu_custom_call.1} parent=19 // pred_fallthru
          _
      $region20: #{tpu_custom_call.1} parent=5 // pred_fallthru
        _
      %p128 = scmp.le.s32.totalorder 1, %s14
      %p129 = scmp.lt.s32.totalorder %s14, 4
      %p130 = pnand %p128, %p129
      %p131 = pneg %p130
      // Predicated region
      $region25: #{tpu_custom_call.1} parent=5 // pred_check
        _
      $region26: #{tpu_custom_call.1} parent=5 // pred_check_branch
        %133 = sbr.rel (%p130) target = $region28
      $region27: #{tpu_custom_call.1} parent=5 // pred_region
        %s134 = ssub.s32 %s14, 1
        %s135 = sand.u32 %s27, 1
        %s136 = scalar_lea.sflag [#allocation3], %s135
        %s137 = sand.u32 %s27, 1
        %s138 = smul.addr %s137, 8
        %s139 = scalar_lea.vmem [#allocation2], %s138
        // Predicated region
        $region29: #{tpu_custom_call.1} parent=27 // pred_check
          %p140 = pneg %p40
        $region30: #{tpu_custom_call.1} parent=27 // pred_check_branch
          %142 = sbr.rel (%p140) target = $region32
        $region31: #{tpu_custom_call.1} parent=27 // pred_region
          %144 = dma.done %s136, 128
        $region32: #{tpu_custom_call.1} parent=27 // pred_fallthru
          _
        %s145 = sand.u32 %s27, 1
        %s146 = scalar_lea.sflag [#allocation3], %s145
        %s147 = sand.u32 %s27, 1
        %s148 = smul.addr %s147, 8
        %s149 = scalar_lea.vmem [#allocation2], %s148
        %p150 = pneg %p40
        %p151 = pneg %p37
        %p152 = pneg %p61
        %p153 = pneg %p58
        %p154 = pneg %p87
        %p155 = pneg %p84
        %s156 = sand.u32 %s74, 1
        %s157 = scalar_lea.sflag [#allocation4], %s156
        %s158 = sand.u32 %s74, 1
        %s159 = smul.addr %s158, 32
        %s160 = scalar_lea.vmem [#allocation5], %s159
        %s161 = smul.u32 8, %s19
        %s162 = smul.u32 8, %s19
        %v163 = vld [vmem:[%s139] sm:$0xff]
        %v164 = vld [vmem:[%s1] sm:$0xf]
        %166 = vset.pattern.permute.xlu0 0
        %167 = vperm.xlu0 %166, %v164
        %v168 = vpop.permute.xlu0 %167
        %v171 = vperm.slane %v163, 0
        %v172 = vperm.slane %v163, 1
        %v173 = vperm.slane %v163, 2
        %v174 = vperm.slane %v163, 3
        %v175 = vperm.slane %v163, 4
        %v176 = vperm.slane %v163, 5
        %v177 = vperm.slane %v163, 6
        %v178 = vperm.slane %v163, 7
        %v187 = vmul.f32 %v168, %v171
        %v188 = vmul.f32 %v168, %v172
        %v189 = vmul.f32 %v168, %v173
        %v190 = vmul.f32 %v168, %v174
        %v191 = vmul.f32 %v168, %v175
        %v192 = vmul.f32 %v168, %v176
        %v193 = vmul.f32 %v168, %v177
        %v194 = vmul.f32 %v168, %v178
        %195 = vset.pattern.permute.xlu0 1
        %196 = vperm.xlu0 %195, %v164
        %v197 = vpop.permute.xlu0 %196
        %v199 = vadd.f32 %v187, %v197
        %v200 = vadd.f32 %v188, %v197
        %v201 = vadd.f32 %v189, %v197
        %v202 = vadd.f32 %v190, %v197
        %v203 = vadd.f32 %v191, %v197
        %v204 = vadd.f32 %v192, %v197
        %v205 = vadd.f32 %v193, %v197
        %v206 = vadd.f32 %v194, %v197
        %v215 = vrot.slane %v200, 4
        %v216 = vrot.slane %v202, 4
        %v217 = vrot.slane %v204, 4
        %v218 = vrot.slane %v206, 4
        %vm219 = vcmask 1043456
        %v220 = vsel %vm219, %v199, %v215
        %v221 = vsel %vm219, %v201, %v216
        %v222 = vsel %vm219, %v203, %v217
        %v223 = vsel %vm219, %v205, %v218
        %228 = vst [vmem:[%s160] sm:$0xff] %v220
        %229 = vst [vmem:[%s160 + $0x8] sm:$0xff] %v221
        %230 = vst [vmem:[%s160 + $0x10] sm:$0xff] %v222
        %231 = vst [vmem:[%s160 + $0x18] sm:$0xff] %v223
        %s232 = sand.u32 %s74, 1
        %s233 = scalar_lea.sflag [#allocation4], %s232
        %s234 = sand.u32 %s74, 1
        %s235 = smul.addr %s234, 32
        %s236 = scalar_lea.vmem [#allocation5], %s235
        // Predicated region
        $region33: #{tpu_custom_call.1} parent=27 // pred_check
          %p237 = pneg %p84
        $region34: #{tpu_custom_call.1} parent=27 // pred_check_branch
          %239 = sbr.rel (%p237) target = $region36
        $region35: #{tpu_custom_call.1} parent=27 // pred_region
          %s240 = smul.u32 8, %s19
          %242 = vsyncadd %s233, 0
          %s243 = smul.addr %s240, 4
          %s244 = scalar_lea.hbm %s2, %s243
          %s246 = sshll.u32 %s236, 4
          %s247 = int_to_ptr.vmem [resolvable:$true] %s246
          %s248 = sshll.u32 %s244, 4
          %s249 = int_to_ptr.hbm [resolvable:$true] %s248
          %251 = dma.vmem_to_hbm [thread:$0]  %s247, 512, %s249, %s233
        $region36: #{tpu_custom_call.1} parent=27 // pred_fallthru
          _
      $region28: #{tpu_custom_call.1} parent=5 // pred_fallthru
        _
      %p252 = scmp.le.s32.totalorder 2, %s14
      // Predicated region
      $region37: #{tpu_custom_call.1} parent=5 // pred_check
        %p253 = pneg %p252
      $region38: #{tpu_custom_call.1} parent=5 // pred_check_branch
        %255 = sbr.rel (%p253) target = $region40
      $region39: #{tpu_custom_call.1} parent=5 // pred_region
        %s256 = ssub.s32 %s14, 2
        // Predicated region
        $region41: #{tpu_custom_call.1} parent=39 // pred_check
          %p257 = pneg %p90
        $region42: #{tpu_custom_call.1} parent=39 // pred_check_branch
          %259 = sbr.rel (%p257) target = $region44
        $region43: #{tpu_custom_call.1} parent=39 // pred_region
          %s260 = sand.u32 %s75, 1
          %s261 = scalar_lea.sflag [#allocation4], %s260
          %s262 = sand.u32 %s75, 1
          %s263 = smul.addr %s262, 32
          %s264 = scalar_lea.vmem [#allocation5], %s263
          %266 = dma.done %s261, 512
        $region44: #{tpu_custom_call.1} parent=39 // pred_fallthru
          _
      $region40: #{tpu_custom_call.1} parent=5 // pred_fallthru
        _
    $region6: #{tpu_custom_call.1} parent=1 // loop_footer
      %s18 = sadd.s32 1, %s14
    $region7: #{tpu_custom_call.1} parent=1 // loop_footer_branch
      %13 = sbr.rel target = $region3
    $region8: #{tpu_custom_call.1} parent=1 // loop_exit
      _
    %267 = vsyncpa [#allocation3], 1
    %s268 = scalar_lea.sflag [#allocation3], 1
    %269 = vsyncpa %s268, 1
    %270 = vsyncpa [#allocation4], 1
    %s271 = scalar_lea.sflag [#allocation4], 1
    %272 = vsyncpa %s271, 1

</llo_original>
